<compile_context>
chip_gen: v7x
topology: tpu7x:2x2x1
jax: 0.10.0
libtpu: 0.0.40
codegen_flags: <defaults>
</compile_context>

<pallas_src>
import jax
import jax.numpy as jnp
from jax.experimental import pallas as pl
from jax.experimental.pallas import tpu as pltpu


# ------------------------------- helpers --------------------------------------
def _round_up(x, m):
    return (x + m - 1) // m * m


def _aligned_divisor_tile(n, target):
    """Largest divisor of n that is a multiple of 8 and <= target; else n (full dim).

    A block that equals the full dimension is always legal, so falling back to n
    keeps odd sequence lengths (e.g. ViT's N=197) working without masking.
    """
    t = min(target, n)
    t -= t % 8
    while t >= 8:
        if n % t == 0:
            return t
        t -= 8
    return n


# ----------------------------- Linear kernel ----------------------------------
def _linear_kernel(x_ref, w_ref, b_ref, o_ref, acc_ref):
    # x: (tm, tk), w: (tn, tk) consumed as-is (contract on K), b: (1, tn)
    @pl.when(pl.program_id(2) == 0)
    def _():
        acc_ref[...] = jnp.zeros_like(acc_ref)

    acc_ref[...] += jax.lax.dot_general(
        x_ref[...], w_ref[...],
        dimension_numbers=(((1,), (1,)), ((), ())),
        preferred_element_type=jnp.float32)

    @pl.when(pl.program_id(2) == pl.num_programs(2) - 1)
    def _():
        o_ref[...] = (acc_ref[...] + b_ref[...]).astype(o_ref.dtype)


def pallas_linear(x, w, b, *, out_dtype=None,
                  tm_target=512, tn_target=512, tk_target=512):
    """y = x @ w.T + b  (nn.Linear semantics). x:(M,K), w:(Nout,K), b:(Nout,)."""
    M, K = x.shape
    Nout = w.shape[0]
    out_dtype = out_dtype if out_dtype is not None else x.dtype

    # (8,128)-aligned tiles + cdiv grid; ragged edges are zero-padded in the wrapper
    # so every load/store is an unmasked, lane-dense block.
    # 512-edge tiles are the v5e/v6e sweet spot and still fit v7x's 64 MiB VMEM
    # (f32 worst case: ~7 MiB incl. double buffering + accumulator).
    tm = min(tm_target, _round_up(M, 8))
    tn = min(tn_target, _round_up(Nout, 128))
    tk = min(tk_target, _round_up(K, 128))
    Mp, Np, Kp = _round_up(M, tm), _round_up(Nout, tn), _round_up(K, tk)

    if (Mp, Kp) != (M, K):
        x = jnp.pad(x, ((0, Mp - M), (0, Kp - K)))
    if (Np, Kp) != (Nout, K):
        w = jnp.pad(w, ((0, Np - Nout), (0, Kp - K)))
    b2 = jnp.pad(b.astype(jnp.float32), (0, Np - Nout)).reshape(1, Np)

    grid = (Mp // tm, Np // tn, Kp // tk)

    flops = 2 * M * Nout * K
    bytes_acc = (M * K * x.dtype.itemsize + Nout * K * w.dtype.itemsize
                 + M * Nout * jnp.dtype(out_dtype).itemsize + Nout * 4)

    out = pl.pallas_call(
        _linear_kernel,
        grid=grid,
        in_specs=[
            pl.BlockSpec((tm, tk), lambda i, j, k: (i, k)),
            pl.BlockSpec((tn, tk), lambda i, j, k: (j, k)),
            pl.BlockSpec((1, tn), lambda i, j, k: (0, j)),
        ],
        out_specs=pl.BlockSpec((tm, tn), lambda i, j, k: (i, j)),
        out_shape=jax.ShapeDtypeStruct((Mp, Np), out_dtype),
        scratch_shapes=[pltpu.VMEM((tm, tn), jnp.float32)],
        compiler_params=pltpu.CompilerParams(
            dimension_semantics=("parallel", "parallel", "arbitrary")),
        cost_estimate=pl.CostEstimate(flops=flops, transcendentals=0,
                                      bytes_accessed=bytes_acc),
    )(x, w, b2)

    if (Mp, Np) != (M, Nout):
        out = out[:M, :Nout]
    return out


# ---------------------------- Attention kernel ---------------------------------
def _make_attn_kernel(*, scale, num_heads, head_dim, with_attn, approx_recip):
    H, D = num_heads, head_dim
    C = H * D

    def kernel(qkv_ref, o_ref, *maybe_a):
        a_ref = maybe_a[0] if with_attn else None
        tq = o_ref.shape[1]                       # query-row tile
        t = pl.program_id(1)
        row0 = pl.multiple_of(t * tq, tq)

        # Static head unroll (H is small); each head's (tq, N) f32 scores / exp die
        # before the next head because the result is stored immediately (no concat,
        # no list of live per-head outputs).
        for h in range(H):
            # Slice the resident (1, N, 3C) Ref so only this head's (.., D) window
            # is read from VMEM.  Scale folded into q (O(tq*D), not O(tq*N)).
            q_h = qkv_ref[0, pl.ds(row0, tq), h * D:(h + 1) * D] * scale      # (tq, D)
            k_h = qkv_ref[0, :, C + h * D:C + (h + 1) * D]                    # (N, D)
            v_h = qkv_ref[0, :, 2 * C + h * D:2 * C + (h + 1) * D]            # (N, D)

            s = jax.lax.dot_general(               # (tq, N), f32 accumulate
                q_h, k_h,
                dimension_numbers=(((1,), (1,)), ((), ())),
                preferred_element_type=jnp.float32)

            m = jnp.max(s, axis=-1, keepdims=True)
            p = jnp.exp(s - m)                                  # unnormalized
            denom = jnp.sum(p, axis=-1, keepdims=True)
            inv = pl.reciprocal(denom, approx=approx_recip)     # (tq, 1)

            if with_attn:
                # True probabilities only when explicitly requested (debug path).
                a_ref[0, h] = (p * inv).astype(a_ref.dtype)

            o_h = jnp.dot(p.astype(v_h.dtype), v_h,
                          preferred_element_type=jnp.float32)   # (tq, D)
            # Deferred softmax normalization: scale the (tq, D) result, not the
            # (tq, N) probs, then store this head's lane slice right away.
            o_ref[0, :, h * D:(h + 1) * D] = (o_h * inv).astype(o_ref.dtype)

    return kernel


def pallas_attention(qkv, num_heads, scale, *, out_dtype, return_attention,
                     approx_recip=True, q_tile_target=256):
    """qkv: (B, N, 3C) -> merged-head out (B, N, C) [, attn (B, H, N, N)]."""
    B, N, C3 = qkv.shape
    C = C3 // 3
    H = num_heads
    D = C // H

    tq = _aligned_divisor_tile(N, q_tile_target)
    grid = (B, N // tq)

    kernel = _make_attn_kernel(scale=scale, num_heads=H, head_dim=D,
                               with_attn=return_attention,
                               approx_recip=approx_recip)

    # Full (N, 3C) block per batch: its index is constant across the q-tile axis,
    # so the pipeline fetches it once per batch and keeps it resident.
    qkv_spec = pl.BlockSpec((1, N, 3 * C), lambda b, t: (b, 0, 0))
    o_spec = pl.BlockSpec((1, tq, C), lambda b, t: (b, t, 0))

    itemsize = jnp.dtype(qkv.dtype).itemsize
    a_dtype = qkv.dtype      # write probs in compute dtype (bf16 on fast path)

    out_shape = jax.ShapeDtypeStruct((B, N, C), out_dtype)
    out_specs = o_spec
    bytes_acc = (qkv.size * itemsize + B * N * C * jnp.dtype(out_dtype).itemsize)
    if return_attention:
        a_spec = pl.BlockSpec((1, H, tq, N), lambda b, t: (b, 0, t, 0))
        out_shape = (out_shape, jax.ShapeDtypeStruct((B, H, N, N), a_dtype))
        out_specs = (o_spec, a_spec)
        bytes_acc += B * H * N * N * jnp.dtype(a_dtype).itemsize

    # Raise the scoped-VMEM cap above the 16/32 MiB default: the resident qkv block
    # is double-buffered by the pipeline and the (tq, N) f32 score intermediates
    # need headroom.  (v7x: 64 MiB physical — see flash-KV TODO for very large N.)
    qkv_block_bytes = N * 3 * C * itemsize
    est = (2 * qkv_block_bytes
           + 2 * tq * C * jnp.dtype(out_dtype).itemsize
           + (2 * H * tq * N * jnp.dtype(a_dtype).itemsize if return_attention else 0)
           + 4 * tq * N * 4)
    vmem_limit = int(min(100 * 1024 * 1024, max(32 * 1024 * 1024, est)))

    flops = 4 * B * H * N * N * D          # QK^T + PV
    result = pl.pallas_call(
        kernel,
        grid=grid,
        in_specs=[qkv_spec],
        out_specs=out_specs,
        out_shape=out_shape,
        compiler_params=pltpu.CompilerParams(
            dimension_semantics=("parallel", "parallel"),
            vmem_limit_bytes=vmem_limit),
        cost_estimate=pl.CostEstimate(flops=flops,
                                      transcendentals=B * H * N * N,
                                      bytes_accessed=bytes_acc),
    )(qkv)

    if return_attention:
        return result
    return result, None


# ------------------------------ Module wrapper ----------------------------------
def multi_head_attention(x, w_qkv, b_qkv, w_proj, b_proj, num_heads,
                         return_attention=False, mxu_bf16=True, approx_recip=True):
    """Forward pass equivalent to the PyTorch MultiHeadAttention module."""
    B, N, C = x.shape
    H = num_heads
    D = C // H
    scale = D ** (-0.5)

    in_dtype = x.dtype
    mxu_dtype = jnp.bfloat16 if mxu_bf16 else x.dtype

    x2 = x.reshape(B * N, C).astype(mxu_dtype)
    wq = w_qkv.astype(mxu_dtype)
    wp = w_proj.astype(mxu_dtype)

    # qkv projection (tiled Pallas matmul); keep MXU dtype so attention DMAs fewer bytes.
    qkv = pallas_linear(x2, wq, b_qkv, out_dtype=mxu_dtype).reshape(B, N, 3 * C)

    # Fused attention: consumes (B, N, 3C) directly, writes merged-head (B, N, C).
    out, attn = pallas_attention(qkv, H, scale, out_dtype=mxu_dtype,
                                 return_attention=return_attention,
                                 approx_recip=approx_recip)

    # Output projection back to the input dtype.
    y = pallas_linear(out.reshape(B * N, C), wp, b_proj,
                      out_dtype=in_dtype).reshape(B, N, C)

    if return_attention:
        return y, attn
    return y


# --------------------------- Pure-JAX reference ----------------------------------
def _ref_mha(x, w_qkv, b_qkv, w_proj, b_proj, num_heads):
    B, N, C = x.shape
    H = num_heads
    D = C // H
    qkv = x @ w_qkv.T + b_qkv
    qkv = qkv.reshape(B, N, 3, H, D).transpose(2, 0, 3, 1, 4)
    q, k, v = qkv[0], qkv[1], qkv[2]
    attn = (q @ jnp.swapaxes(k, -2, -1)) * (D ** -0.5)
    attn = jax.nn.softmax(attn, axis=-1)
    out = (attn @ v).transpose(0, 2, 1, 3).reshape(B, N, C)
    return out @ w_proj.T + b_proj, attn


# ----------------------------------- Main -----------------------------------------
if __name__ == "__main__":
    B, N, C = 2, 8, 32
    num_heads = 4                              # head_dim = 8

    key = jax.random.PRNGKey(0)
    kx, kw1, kw2, kb2 = jax.random.split(key, 4)

    x = jax.random.normal(kx, (B, N, C), dtype=jnp.float32)
    # nn.Linear(dim, dim*3, bias=False)  -> weight (3C, C), bias fixed to zeros
    w_qkv = jax.random.normal(kw1, (3 * C, C), dtype=jnp.float32) * 0.02
    b_qkv = jnp.zeros((3 * C,), dtype=jnp.float32)     # qkv_bias=False
    # nn.Linear(dim, dim)
    w_proj = jax.random.normal(kw2, (C, C), dtype=jnp.float32) * 0.02
    b_proj = jax.random.normal(kb2, (C,), dtype=jnp.float32) * 0.02

    y_ref, attn_ref = _ref_mha(x, w_qkv, b_qkv, w_proj, b_proj, num_heads)

    # 1) Precise path (f32 MXU operands, exact reciprocal) + attention probs output.
    y, attn = multi_head_attention(x, w_qkv, b_qkv, w_proj, b_proj, num_heads,
                                   return_attention=True,
                                   mxu_bf16=False, approx_recip=False)
    y = jax.block_until_ready(y)
    attn = jax.block_until_ready(attn)
    assert y.shape == (B, N, C)
    assert attn.shape == (B, num_heads, N, N)
    assert jnp.allclose(y, y_ref, atol=1e-5, rtol=1e-4)
    assert jnp.allclose(attn.astype(jnp.float32), attn_ref, atol=1e-5, rtol=1e-4)

    # 2) Fast path (bf16 MXU operands, approx EUP reciprocal, no attn writeback).
    y_fast = multi_head_attention(x, w_qkv, b_qkv, w_proj, b_proj, num_heads,
                                  return_attention=False,
                                  mxu_bf16=True, approx_recip=True)
    y_fast = jax.block_until_ready(y_fast)
    assert y_fast.shape == (B, N, C)
    assert jnp.allclose(y_fast, y_ref, atol=1e-2, rtol=1e-2)

    print("KERNEL_OK")
</pallas_src>

<mosaic_0001>
module attributes {stable_mosaic.version = 11 : i64} {
  func.func @_linear_kernel(%arg0: i32, %arg1: i32, %arg2: i32, %arg3: memref<16x128xf32, #tpu.memory_space<vmem>>, %arg4: memref<128x128xf32, #tpu.memory_space<vmem>>, %arg5: memref<1x128xf32, #tpu.memory_space<vmem>>, %arg6: memref<16x128xf32, #tpu.memory_space<vmem>>, %arg7: memref<16x128xf32, #tpu.memory_space<vmem>>) attributes {dimension_semantics = [#tpu.dimension_semantics<parallel>, #tpu.dimension_semantics<parallel>, #tpu.dimension_semantics<arbitrary>], iteration_bounds = array<i64: 1, 1, 1>, scalar_prefetch = 0 : i64, scratch_operands = 1 : i64, tpu.core_type = #tpu.core_type<tc>, window_params = [{transform_indices = @transform_0, window_bounds = array<i64: 16, 128>}, {transform_indices = @transform_1, window_bounds = array<i64: 128, 128>}, {transform_indices = @transform_2, window_bounds = array<i64: 1, 128>}, {transform_indices = @transform_3, window_bounds = array<i64: 16, 128>}]} {
    %c0_i32 = arith.constant 0 : i32
    %0 = arith.cmpi eq, %arg2, %c0_i32 : i32
    %1 = arith.extui %0 : i1 to i32
    %c0_i32_0 = arith.constant 0 : i32
    %2 = arith.cmpi ne, %1, %c0_i32_0 : i32
    scf.if %2 {
      %cst_10 = arith.constant 0.000000e+00 : f32
      %12 = vector.broadcast %cst_10 : f32 to vector<16x128xf32>
      %c0_11 = arith.constant 0 : index
      %c0_12 = arith.constant 0 : index
      %13 = vector.load %arg7[%c0_11, %c0_12] : memref<16x128xf32, #tpu.memory_space<vmem>>, vector<16x128xf32>
      tpu.vector_store %arg7[%c0_11, %c0_12], %12 {strides = array<i32>} : memref<16x128xf32, #tpu.memory_space<vmem>>, vector<16x128xf32>,
    } else {
    }
    %c0 = arith.constant 0 : index
    %c0_1 = arith.constant 0 : index
    %3 = vector.load %arg7[%c0, %c0_1] : memref<16x128xf32, #tpu.memory_space<vmem>>, vector<16x128xf32>
    %c0_2 = arith.constant 0 : index
    %c0_3 = arith.constant 0 : index
    %4 = vector.load %arg3[%c0_2, %c0_3] : memref<16x128xf32, #tpu.memory_space<vmem>>, vector<16x128xf32>
    %c0_4 = arith.constant 0 : index
    %c0_5 = arith.constant 0 : index
    %5 = vector.load %arg4[%c0_4, %c0_5] : memref<128x128xf32, #tpu.memory_space<vmem>>, vector<128x128xf32>
    %cst = arith.constant dense<0.000000e+00> : vector<16x128xf32>
    %6 = tpu.matmul %4, %5, %cst {dimension_numbers = #tpu.dot_dimension_numbers<[1], [1], [0], [0], [0, 0, 1, 0], [], []>} : vector<16x128xf32>, vector<128x128xf32>, vector<16x128xf32> -> vector<16x128xf32>
    %7 = arith.addf %3, %6 : vector<16x128xf32>
    %c0_6 = arith.constant 0 : index
    %c0_7 = arith.constant 0 : index
    %8 = vector.load %arg7[%c0_6, %c0_7] : memref<16x128xf32, #tpu.memory_space<vmem>>, vector<16x128xf32>
    tpu.vector_store %arg7[%c0_6, %c0_7], %7 {strides = array<i32>} : memref<16x128xf32, #tpu.memory_space<vmem>>, vector<16x128xf32>,
    %c0_i32_8 = arith.constant 0 : i32
    %9 = arith.cmpi eq, %arg2, %c0_i32_8 : i32
    %10 = arith.extui %9 : i1 to i32
    %c0_i32_9 = arith.constant 0 : i32
    %11 = arith.cmpi ne, %10, %c0_i32_9 : i32
    scf.if %11 {
      %c0_10 = arith.constant 0 : index
      %c0_11 = arith.constant 0 : index
      %12 = vector.load %arg7[%c0_10, %c0_11] : memref<16x128xf32, #tpu.memory_space<vmem>>, vector<16x128xf32>
      %c0_12 = arith.constant 0 : index
      %c0_13 = arith.constant 0 : index
      %13 = vector.load %arg5[%c0_12, %c0_13] : memref<1x128xf32, #tpu.memory_space<vmem>>, vector<1x128xf32>
      %14 = vector.broadcast %13 : vector<1x128xf32> to vector<16x128xf32>
      %15 = arith.addf %12, %14 : vector<16x128xf32>
      %c0_14 = arith.constant 0 : index
      %c0_15 = arith.constant 0 : index
      %16 = vector.load %arg6[%c0_14, %c0_15] : memref<16x128xf32, #tpu.memory_space<vmem>>, vector<16x128xf32>
      tpu.vector_store %arg6[%c0_14, %c0_15], %15 {strides = array<i32>} : memref<16x128xf32, #tpu.memory_space<vmem>>, vector<16x128xf32>,
    } else {
    }
    return
  }
  func.func @transform_0(%arg0: i32, %arg1: i32, %arg2: i32) -> (i32, i32) {
    %c0_i32 = arith.constant 0 : i32
    return %arg0, %arg2 : i32, i32
  }
  func.func @transform_1(%arg0: i32, %arg1: i32, %arg2: i32) -> (i32, i32) {
    %c0_i32 = arith.constant 0 : i32
    return %arg1, %arg2 : i32, i32
  }
  func.func @transform_2(%arg0: i32, %arg1: i32, %arg2: i32) -> (i32, i32) {
    %c0_i32 = arith.constant 0 : i32
    %c0_i32_0 = arith.constant 0 : i32
    return %c0_i32, %arg1 : i32, i32
  }
  func.func @transform_3(%arg0: i32, %arg1: i32, %arg2: i32) -> (i32, i32) {
    %c0_i32 = arith.constant 0 : i32
    return %arg0, %arg1 : i32, i32
  }
}

</mosaic_0001>

<llo_original>
// kernel: tpu_custom_call.1
$region0: #{tpu_custom_call.1}
  #allocation0 [shape = 'u32[]', space=smem, size = 0x4, offset = 0x4, fixed_abs, tag = 'smem constant byte address 0x4 - core index']
  #allocation1 [shape = 'u32[144,128]{1,0:T(1,128)}', space=vmem, size = 0x12000, scoped, tag = 'internal scratch']
  #allocation2 [shape = 'f32[16,128]{1,0:T(8,128)}', space=vmem, size = 0x2000, scoped, tag = 'scratch operand']
  %s0 = inlined_call_operand.hbm [shape: f32[16,128], index: 0, kind: input, shape index: {}]
  %s1 = inlined_call_operand.hbm [shape: f32[128,128], index: 1, kind: input, shape index: {}]
  %s2 = inlined_call_operand.vmem [shape: f32[1,128], index: 2, kind: input, shape index: {}]
  %s3 = inlined_call_operand.hbm [shape: f32[16,128], index: 3, kind: output, shape index: {}]
  %s4 = sld [smem:[#allocation0]]
  $region38: #{tpu_custom_call.1} parent=0
    _
  %s6 = ssub.s32 1, %s4
  %s7 = scalar_select 0, %s6, %s4
  $region1: #{tpu_custom_call.1} parent=0
    #allocation3 [shape = 'u8[8192]{0}', space=vmem, size = 0x2000, scoped, tag = 'input window, operand 0, single buffered']
    #allocation4 [shape = 's32[1]{0}', space=sflag, size = 0x4, scoped, tag = 'scoped memory for tpu_custom_call.1']
    #allocation5 [shape = 's32[1]{0}', space=sflag, size = 0x4, scoped, tag = 'scoped memory for tpu_custom_call.1']
    #allocation6 [shape = 'u8[65536]{0}', space=vmem, size = 0x10000, scoped, tag = 'input window, operand 1, single buffered']
    #allocation7 [shape = 's32[1]{0}', space=sflag, size = 0x4, scoped, tag = 'scoped memory for tpu_custom_call.1']
    #allocation8 [shape = 'u8[8192]{0}', space=vmem, size = 0x2000, scoped, tag = 'output window, operand 0, single buffered']
    %8 = vsyncpa [#allocation4], 0
    %9 = vsyncpa [#allocation7], 0
    %10 = vsyncpa [#allocation5], 0
    // Predicated region
    $region2: #{tpu_custom_call.1} parent=1 // pred_check
      _
    $region3: #{tpu_custom_call.1} parent=1 // pred_check_branch
      %12 = sbr.rel (0) target = $region5
    $region4: #{tpu_custom_call.1} parent=1 // pred_region
      %s14 = ssub.s32 256, 256
      %15 = vsyncadd [#allocation4], %s14
      %s16 = sshll.u32 [#allocation3], 4
      %s17 = int_to_ptr.vmem [resolvable:$true] %s16
      %22 = dma.hbm_to_vmem [thread:$0]  %s0, 256, %s17, [#allocation4], 128, 128, 8
    $region5: #{tpu_custom_call.1} parent=1 // pred_fallthru
      _
    // Predicated region
    $region6: #{tpu_custom_call.1} parent=1 // pred_check
      _
    $region7: #{tpu_custom_call.1} parent=1 // pred_check_branch
      %24 = sbr.rel (0) target = $region9
    $region8: #{tpu_custom_call.1} parent=1 // pred_region
      %s26 = ssub.s32 2048, 2048
      %27 = vsyncadd [#allocation7], %s26
      %s28 = sshll.u32 [#allocation6], 4
      %s29 = int_to_ptr.vmem [resolvable:$true] %s28
      %34 = dma.hbm_to_vmem [thread:$0]  %s1, 2048, %s29, [#allocation7], 128, 128, 8
    $region9: #{tpu_custom_call.1} parent=1 // pred_fallthru
      _
    // Predicated region
    $region10: #{tpu_custom_call.1} parent=1 // pred_check
      _
    $region11: #{tpu_custom_call.1} parent=1 // pred_check_branch
      %36 = sbr.rel (0) target = $region13
    $region12: #{tpu_custom_call.1} parent=1 // pred_region
      _
    $region13: #{tpu_custom_call.1} parent=1 // pred_fallthru
      _
    // Predicated region
    $region14: #{tpu_custom_call.1} parent=1 // pred_check
      _
    $region15: #{tpu_custom_call.1} parent=1 // pred_check_branch
      %38 = sbr.rel (0) target = $region17
    $region16: #{tpu_custom_call.1} parent=1 // pred_region
      %39 = dma.done [#allocation4], 256
    $region17: #{tpu_custom_call.1} parent=1 // pred_fallthru
      _
    // Predicated region
    $region18: #{tpu_custom_call.1} parent=1 // pred_check
      _
    $region19: #{tpu_custom_call.1} parent=1 // pred_check_branch
      %41 = sbr.rel (0) target = $region21
    $region20: #{tpu_custom_call.1} parent=1 // pred_region
      %42 = dma.done [#allocation7], 2048
    $region21: #{tpu_custom_call.1} parent=1 // pred_fallthru
      _
    %p43 = scmp.eq.s32.totalorder 0, 0
    // Predicated region
    $region22: #{tpu_custom_call.1} parent=1 // pred_check
      %p44 = pneg %p43
    $region23: #{tpu_custom_call.1} parent=1 // pred_check_branch
      %46 = sbr.rel (%p44) target = $region25
    $region24: #{tpu_custom_call.1} parent=1 // pred_region
      %47 = vst [vmem:[#allocation2] sm:$0xff] 0.0
      %48 = vst [vmem:[#allocation2 + $0x8] sm:$0xff] 0.0
    $region25: #{tpu_custom_call.1} parent=1 // pred_fallthru
      _
    %v49 = vld [vmem:[#allocation2] sm:$0xff]
    %v50 = vld [vmem:[#allocation2 + $0x8] sm:$0xff]
    %v51 = vld [vmem:[#allocation3] sm:$0xff]
    %v52 = vld [vmem:[#allocation3 + $0x8] sm:$0xff]
    %v53 = vld [vmem:[#allocation6] sm:$0xff]
    %v54 = vld [vmem:[#allocation6 + $0x8] sm:$0xff]
    %v55 = vld [vmem:[#allocation6 + $0x10] sm:$0xff]
    %v56 = vld [vmem:[#allocation6 + $0x18] sm:$0xff]
    %v57 = vld [vmem:[#allocation6 + $0x20] sm:$0xff]
    %v58 = vld [vmem:[#allocation6 + $0x28] sm:$0xff]
    %v59 = vld [vmem:[#allocation6 + $0x30] sm:$0xff]
    %v60 = vld [vmem:[#allocation6 + $0x38] sm:$0xff]
    %v61 = vld [vmem:[#allocation6 + $0x40] sm:$0xff]
    %v62 = vld [vmem:[#allocation6 + $0x48] sm:$0xff]
    %v63 = vld [vmem:[#allocation6 + $0x50] sm:$0xff]
    %v64 = vld [vmem:[#allocation6 + $0x58] sm:$0xff]
    %v65 = vld [vmem:[#allocation6 + $0x60] sm:$0xff]
    %v66 = vld [vmem:[#allocation6 + $0x68] sm:$0xff]
    %v67 = vld [vmem:[#allocation6 + $0x70] sm:$0xff]
    %v68 = vld [vmem:[#allocation6 + $0x78] sm:$0xff]
    %69 = vmatprep.subr.mxu0 0.0
    %70 = vmatpush1.xpose.msra.mxu0 %v53
    %71 = vmatprep.subr.mxu0 0.0
    %72 = vmatpush1.xpose.msra.mxu0 %v54
    %73 = vmatprep.subr.mxu0 0.0
    %74 = vmatpush1.xpose.msra.mxu0 %v55
    %75 = vmatprep.subr.mxu0 0.0
    %76 = vmatpush1.xpose.msra.mxu0 %v56
    %77 = vmatprep.subr.mxu0 0.0
    %78 = vmatpush1.xpose.msra.mxu0 %v57
    %79 = vmatprep.subr.mxu0 0.0
    %80 = vmatpush1.xpose.msra.mxu0 %v58
    %81 = vmatprep.subr.mxu0 0.0
    %82 = vmatpush1.xpose.msra.mxu0 %v59
    %83 = vmatprep.subr.mxu0 0.0
    %84 = vmatpush1.xpose.msra.mxu0 %v60
    %85 = vmatprep.subr.mxu0 0.0
    %86 = vmatpush1.xpose.msra.mxu0 %v61
    %87 = vmatprep.subr.mxu0 0.0
    %88 = vmatpush1.xpose.msra.mxu0 %v62
    %89 = vmatprep.subr.mxu0 0.0
    %90 = vmatpush1.xpose.msra.mxu0 %v63
    %91 = vmatprep.subr.mxu0 0.0
    %92 = vmatpush1.xpose.msra.mxu0 %v64
    %93 = vmatprep.subr.mxu0 0.0
    %94 = vmatpush1.xpose.msra.mxu0 %v65
    %95 = vmatprep.subr.mxu0 0.0
    %96 = vmatpush1.xpose.msra.mxu0 %v66
    %97 = vmatprep.subr.mxu0 0.0
    %98 = vmatpush1.xpose.msra.mxu0 %v67
    %99 = vmatprep.subr.mxu0 0.0
    %100 = vmatpush1.xpose.msra.mxu0 %v68
    %101 = vmatprep.subr.mxu0 0.0
    %102 = vmatpush1.xpose.msra.mxu0 0.0
    %103 = vmatprep.subr.mxu0 0.0
    %104 = vmatpush1.xpose.msra.mxu0 0.0
    %105 = vmatprep.subr.mxu0 0.0
    %106 = vmatpush1.xpose.msra.mxu0 0.0
    %107 = vmatprep.subr.mxu0 0.0
    %108 = vmatpush1.xpose.msra.mxu0 0.0
    %109 = vmatprep.subr.mxu0 0.0
    %110 = vmatpush1.xpose.msra.mxu0 0.0
    %111 = vmatprep.subr.mxu0 0.0
    %112 = vmatpush1.xpose.msra.mxu0 0.0
    %113 = vmatprep.subr.mxu0 0.0
    %114 = vmatpush1.xpose.msra.mxu0 0.0
    %115 = vmatprep.subr.mxu0 0.0
    %116 = vmatpush1.xpose.msra.mxu0 0.0
    %117 = vmatprep.subr.mxu0 0.0
    %118 = vmatpush1.xpose.msra.mxu0 0.0
    %119 = vmatprep.subr.mxu0 0.0
    %120 = vmatpush1.xpose.msra.mxu0 0.0
    %121 = vmatprep.subr.mxu0 0.0
    %122 = vmatpush1.xpose.msra.mxu0 0.0
    %123 = vmatprep.subr.mxu0 0.0
    %124 = vmatpush1.xpose.msra.mxu0 0.0
    %125 = vmatprep.subr.mxu0 0.0
    %126 = vmatpush1.xpose.msra.mxu0 0.0
    %127 = vmatprep.subr.mxu0 0.0
    %128 = vmatpush1.xpose.msra.mxu0 0.0
    %129 = vmatprep.subr.mxu0 0.0
    %130 = vmatpush1.xpose.msra.mxu0 0.0
    %131 = vmatprep.subr.mxu0 0.0
    %132 = vmatpush1.xpose.msra.mxu0 0.0
    %133 = vmatprep.mubr.f32.mxu0 0.0
    %134 = vmatmul.mubr.f32.gmra.mrb[0].mxu0 %v51
    %v135 = vpop.f32.mrb[0].mxu0
    %v136 = vadd.f32 0.0, %v135
    %v137 = vpop.f32.mrb[0].mxu0
    %138 = vmatprep.mubr.f32.mxu0 0.0
    %139 = vmatmul.mubr.f32.gmra.mrb[0].mxu0 %v52
    %v140 = vpop.f32.mrb[0].mxu0
    %v141 = vadd.f32 0.0, %v140
    %v142 = vpop.f32.mrb[0].mxu0
    %143 = vdwg.mxu0
    %v144 = vadd.f32 %v49, %v136
    %v145 = vadd.f32 %v50, %v141
    %146 = vst [vmem:[#allocation2] sm:$0xff] %v144
    %147 = vst [vmem:[#allocation2 + $0x8] sm:$0xff] %v145
    // Predicated region
    $region26: #{tpu_custom_call.1} parent=1 // pred_check
      %p148 = pneg %p43
    $region27: #{tpu_custom_call.1} parent=1 // pred_check_branch
      %150 = sbr.rel (%p148) target = $region29
    $region28: #{tpu_custom_call.1} parent=1 // pred_region
      %v151 = vld [vmem:[#allocation2] sm:$0xff]
      %v152 = vld [vmem:[#allocation2 + $0x8] sm:$0xff]
      %v153 = vld [vmem:[%s2] sm:$0x1]
      %v155 = vlaneseq
      %v156 = vshrl.u32 %v155, 7
      %v157 = vsub.s32 0, %v156
      %v158 = vrot.slane %v153, %v157
      %v160 = vadd.f32 %v151, %v158
      %v161 = vadd.f32 %v152, %v158
      %162 = vst [vmem:[#allocation8] sm:$0xff] %v160
      %163 = vst [vmem:[#allocation8 + $0x8] sm:$0xff] %v161
    $region29: #{tpu_custom_call.1} parent=1 // pred_fallthru
      _
    // Predicated region
    $region30: #{tpu_custom_call.1} parent=1 // pred_check
      _
    $region31: #{tpu_custom_call.1} parent=1 // pred_check_branch
      %165 = sbr.rel (0) target = $region33
    $region32: #{tpu_custom_call.1} parent=1 // pred_region
      %s167 = ssub.s32 256, 256
      %168 = vsyncadd [#allocation5], %s167
      %s169 = sshll.u32 [#allocation8], 4
      %s170 = int_to_ptr.vmem [resolvable:$true] %s169
      %175 = dma.vmem_to_hbm [thread:$0]  %s170, 256, %s3, [#allocation5], 128, 128, 8
    $region33: #{tpu_custom_call.1} parent=1 // pred_fallthru
      _
    // Predicated region
    $region34: #{tpu_custom_call.1} parent=1 // pred_check
      _
    $region35: #{tpu_custom_call.1} parent=1 // pred_check_branch
      %177 = sbr.rel (0) target = $region37
    $region36: #{tpu_custom_call.1} parent=1 // pred_region
      %178 = dma.done [#allocation5], 256
    $region37: #{tpu_custom_call.1} parent=1 // pred_fallthru
      _
    %179 = vsyncpa [#allocation4], 1
    %180 = vsyncpa [#allocation7], 1
    %181 = vsyncpa [#allocation5], 1

</llo_original>
